<compile_context>
chip_gen: v5e
topology: v5e:2x2
jax: 0.10.0
libtpu: 0.0.40
codegen_flags: <defaults>
</compile_context>

<pallas_src>
import jax
import jax.numpy as jnp
from jax.experimental import pallas as pl
from jax.experimental.pallas import tpu as pltpu

NEG_SLOPE = 0.01  # F.leaky_relu default


def _round_up(x, m):
    return ((x + m - 1) // m) * m


def _leaky_relu(x):
    return jnp.where(x > 0, x, NEG_SLOPE * x)


def critic_layer_dims(input_dim, output_dim):
    """Replicates the (truncating) layer-size arithmetic of the PyTorch module."""
    dims = [(input_dim, 60 * input_dim)]
    for i in range(2, 8):
        dims.append((int(60 * input_dim / (i - 1)), int(60 * input_dim / i)))
    dims.append((int(60 * input_dim / 7), output_dim))
    return dims


def init_critic_params(key, input_dim, output_dim):
    """Deterministic init mimicking nn.Linear's default U(-1/sqrt(fan_in), +).

    Weights are stored (in, out) so the kernel computes y = x @ W + b.
    """
    params = []
    for (fan_in, fan_out) in critic_layer_dims(input_dim, output_dim):
        key, kw, kb = jax.random.split(key, 3)
        bound = 1.0 / jnp.sqrt(jnp.float32(fan_in))
        w = jax.random.uniform(kw, (fan_in, fan_out), jnp.float32, -bound, bound)
        b = jax.random.uniform(kb, (1, fan_out), jnp.float32, -bound, bound)
        params.append((w, b))
    return params


def prepare_critic(params, input_dim, output_dim):
    """Pack all layers into two contiguous buffers (zero-padded, exact math):

      w_packed : (sum_i in_pad_i, max_out_pad) bf16  -- row-stacked weights
      b_packed : (round_up(n_layers, 8), max_out_pad) f32

    Every logical width is padded to a multiple of 128 (lane-dense matmul
    chain, sublane-aligned row offsets); padded rows/cols are zero so the
    forward pass is bit-for-bit equivalent to the unpadded computation.
    """
    dims = critic_layer_dims(input_dim, output_dim)
    n_layers = len(dims)
    padded = [(_round_up(i, 128), _round_up(o, 128)) for (i, o) in dims]
    max_out = max(o for (_, o) in padded)
    total_rows = sum(i for (i, _) in padded)

    w_packed = jnp.zeros((total_rows, max_out), jnp.bfloat16)
    b_packed = jnp.zeros((_round_up(n_layers, 8), max_out), jnp.float32)

    meta = []
    row = 0
    for li, ((w, b), (p_in, p_out)) in enumerate(zip(params, padded)):
        in_d, out_d = w.shape
        w_packed = w_packed.at[row:row + in_d, :out_d].set(w.astype(jnp.bfloat16))
        b_packed = b_packed.at[li, :out_d].set(b.reshape(-1))
        meta.append((row, p_in, p_out))
        row += p_in

    return dict(
        w_packed=w_packed,
        b_packed=b_packed,
        meta=tuple(meta),
        n_layers=n_layers,
        d_in_pad=padded[0][0],
        d_out_pad=padded[-1][1],
        input_dim=input_dim,
        output_dim=output_dim,
    )


def _make_critic_kernel(meta, n_layers):
    """meta: tuple of (row_offset, in_padded, out_padded) per layer (static)."""

    def kernel(x_ref, w_ref, b_ref, o_ref):
        x = x_ref[...]  # f32 (tile_b, d_in_pad)
        for li, (row, p_in, p_out) in enumerate(meta):
            # Static, tile-aligned slices of the packed param buffers.
            w = w_ref[row:row + p_in, :p_out]            # bf16 (p_in, p_out)
            b = b_ref[li:li + 1, :p_out]                 # f32  (1, p_out)
            y = jnp.dot(x.astype(jnp.bfloat16), w,
                        preferred_element_type=jnp.float32) + b
            x = y if li == n_layers - 1 else _leaky_relu(y)
        o_ref[...] = x.astype(o_ref.dtype)

    return kernel


def critic_forward(state, prepared, tile_b=128):
    w_packed = prepared["w_packed"]
    b_packed = prepared["b_packed"]
    meta = prepared["meta"]
    n_layers = prepared["n_layers"]
    d_in_pad = prepared["d_in_pad"]
    d_out_pad = prepared["d_out_pad"]
    output_dim = prepared["output_dim"]

    batch, in_dim = state.shape
    tb = min(tile_b, _round_up(batch, 8))          # batch tile (sublane aligned)
    b_pad = _round_up(batch, tb)

    # Zero-pad the state to (b_pad, d_in_pad); padded rows/lanes contribute 0.
    x = jnp.zeros((b_pad, d_in_pad), jnp.float32)
    x = x.at[:batch, :in_dim].set(state.astype(jnp.float32))

    grid = (b_pad // tb,)

    flops = 2 * b_pad * sum(p_in * p_out for (_, p_in, p_out) in meta)
    bytes_accessed = (w_packed.size * 2 + b_packed.size * 4
                      + x.size * 4 + b_pad * d_out_pad * 4)
    cost = pl.CostEstimate(flops=flops, transcendentals=0,
                           bytes_accessed=bytes_accessed)

    # Explicit VMEM budget: resident packed params (x2 buffering), I/O tiles,
    # generous activation scratch; capped at v7x's 64 MiB physical VMEM.
    w_bytes = w_packed.size * 2
    b_bytes = b_packed.size * 4
    io_bytes = tb * (d_in_pad + d_out_pad) * 4
    act_bytes = 16 * tb * max(p_out for (_, _, p_out) in meta) * 4
    vmem_limit = min(64 * 1024 * 1024,
                     max(2 * (w_bytes + b_bytes + io_bytes) + act_bytes + (2 << 20),
                         16 * 1024 * 1024))

    out = pl.pallas_call(
        _make_critic_kernel(meta, n_layers),
        out_shape=jax.ShapeDtypeStruct((b_pad, d_out_pad), jnp.float32),
        grid=grid,
        in_specs=[
            pl.BlockSpec((tb, d_in_pad), lambda i: (i, 0)),        # state tile
            pl.BlockSpec(w_packed.shape, lambda i: (0, 0)),        # resident weights
            pl.BlockSpec(b_packed.shape, lambda i: (0, 0)),        # resident biases
        ],
        out_specs=pl.BlockSpec((tb, d_out_pad), lambda i: (i, 0)),
        compiler_params=pltpu.CompilerParams(
            dimension_semantics=("parallel",),
            vmem_limit_bytes=int(vmem_limit)),
        cost_estimate=cost,
    )(x, w_packed, b_packed)

    return out[:batch, :output_dim]


def critic_forward_ref(state, params):
    """Pure-JAX reference mirroring the kernel numerics (bf16 in, f32 accum)."""
    x = state.astype(jnp.float32)
    n = len(params)
    for li, (w, b) in enumerate(params):
        y = jnp.dot(x.astype(jnp.bfloat16), w.astype(jnp.bfloat16),
                    preferred_element_type=jnp.float32) + b
        x = y if li == n - 1 else _leaky_relu(y)
    return x


if __name__ == "__main__":
    input_dim = 8     # -> layer widths: 480, 240, 160, 120, 96, 80, 68, output
    output_dim = 1
    batch = 2

    key = jax.random.PRNGKey(0)
    key, kx = jax.random.split(key)
    state = jax.random.normal(kx, (batch, input_dim), jnp.float32)

    params = init_critic_params(key, input_dim, output_dim)
    prepared = prepare_critic(params, input_dim, output_dim)

    out = critic_forward(state, prepared)
    out = jax.block_until_ready(out)

    ref = critic_forward_ref(state, params)
    assert out.shape == (batch, output_dim)
    assert jnp.allclose(out, ref, atol=1e-3, rtol=1e-3), (out, ref)

    print("KERNEL_OK")
</pallas_src>

<mosaic_0001>
module attributes {stable_mosaic.version = 11 : i64} {
  func.func @kernel(%arg0: i32, %arg1: memref<8x128xf32, #tpu.memory_space<vmem>>, %arg2: memref<1664x512xbf16, #tpu.memory_space<vmem>>, %arg3: memref<8x512xf32, #tpu.memory_space<vmem>>, %arg4: memref<8x128xf32, #tpu.memory_space<vmem>>) attributes {dimension_semantics = [#tpu.dimension_semantics<parallel>], iteration_bounds = array<i64: 1>, scalar_prefetch = 0 : i64, scratch_operands = 0 : i64, tpu.core_type = #tpu.core_type<tc>, window_params = [{transform_indices = @transform_0, window_bounds = array<i64: 8, 128>}, {pipeline_mode = #tpu.pipeline_mode<synchronous>, transform_indices = @transform_1, window_bounds = array<i64: 1664, 512>}, {pipeline_mode = #tpu.pipeline_mode<synchronous>, transform_indices = @transform_2, window_bounds = array<i64: 8, 512>}, {transform_indices = @transform_3, window_bounds = array<i64: 8, 128>}]} {
    %c0 = arith.constant 0 : index
    %c0_0 = arith.constant 0 : index
    %0 = vector.load %arg1[%c0, %c0_0] : memref<8x128xf32, #tpu.memory_space<vmem>>, vector<8x128xf32>
    %c0_1 = arith.constant 0 : index
    %c0_2 = arith.constant 0 : index
    %1 = vector.load %arg2[%c0_1, %c0_2] : memref<1664x512xbf16, #tpu.memory_space<vmem>>, vector<128x512xbf16>
    %c0_3 = arith.constant 0 : index
    %c0_4 = arith.constant 0 : index
    %2 = vector.load %arg3[%c0_3, %c0_4] : memref<8x512xf32, #tpu.memory_space<vmem>>, vector<1x512xf32>
    %3 = arith.truncf %0 : vector<8x128xf32> to vector<8x128xbf16>
    %cst = arith.constant dense<0.000000e+00> : vector<8x512xf32>
    %4 = tpu.matmul %3, %1, %cst {dimension_numbers = #tpu.dot_dimension_numbers<[1], [0], [0], [1], [0, 0, 1, 1], [], []>} : vector<8x128xbf16>, vector<128x512xbf16>, vector<8x512xf32> -> vector<8x512xf32>
    %5 = vector.broadcast %2 : vector<1x512xf32> to vector<8x512xf32>
    %6 = arith.addf %4, %5 : vector<8x512xf32>
    %cst_5 = arith.constant 0.000000e+00 : f32
    %7 = vector.broadcast %cst_5 : f32 to vector<8x512xf32>
    %8 = arith.cmpf ogt, %6, %7 : vector<8x512xf32>
    %cst_6 = arith.constant 0.00999999977 : f32
    %9 = vector.broadcast %cst_6 : f32 to vector<8x512xf32>
    %10 = arith.mulf %9, %6 : vector<8x512xf32>
    %11 = arith.select %8, %6, %10 : vector<8x512xi1>, vector<8x512xf32>
    %c128 = arith.constant 128 : index
    %c0_7 = arith.constant 0 : index
    %12 = vector.load %arg2[%c128, %c0_7] : memref<1664x512xbf16, #tpu.memory_space<vmem>>, vector<512x256xbf16>
    %c1 = arith.constant 1 : index
    %c0_8 = arith.constant 0 : index
    %13 = vector.load %arg3[%c1, %c0_8] : memref<8x512xf32, #tpu.memory_space<vmem>>, vector<1x256xf32>
    %14 = arith.truncf %11 : vector<8x512xf32> to vector<8x512xbf16>
    %cst_9 = arith.constant dense<0.000000e+00> : vector<8x256xf32>
    %15 = tpu.matmul %14, %12, %cst_9 {dimension_numbers = #tpu.dot_dimension_numbers<[1], [0], [0], [1], [0, 0, 1, 1], [], []>} : vector<8x512xbf16>, vector<512x256xbf16>, vector<8x256xf32> -> vector<8x256xf32>
    %16 = vector.broadcast %13 : vector<1x256xf32> to vector<8x256xf32>
    %17 = arith.addf %15, %16 : vector<8x256xf32>
    %cst_10 = arith.constant 0.000000e+00 : f32
    %18 = vector.broadcast %cst_10 : f32 to vector<8x256xf32>
    %19 = arith.cmpf ogt, %17, %18 : vector<8x256xf32>
    %cst_11 = arith.constant 0.00999999977 : f32
    %20 = vector.broadcast %cst_11 : f32 to vector<8x256xf32>
    %21 = arith.mulf %20, %17 : vector<8x256xf32>
    %22 = arith.select %19, %17, %21 : vector<8x256xi1>, vector<8x256xf32>
    %c640 = arith.constant 640 : index
    %c0_12 = arith.constant 0 : index
    %23 = vector.load %arg2[%c640, %c0_12] : memref<1664x512xbf16, #tpu.memory_space<vmem>>, vector<256x256xbf16>
    %c2 = arith.constant 2 : index
    %c0_13 = arith.constant 0 : index
    %24 = vector.load %arg3[%c2, %c0_13] : memref<8x512xf32, #tpu.memory_space<vmem>>, vector<1x256xf32>
    %25 = arith.truncf %22 : vector<8x256xf32> to vector<8x256xbf16>
    %cst_14 = arith.constant dense<0.000000e+00> : vector<8x256xf32>
    %26 = tpu.matmul %25, %23, %cst_14 {dimension_numbers = #tpu.dot_dimension_numbers<[1], [0], [0], [1], [0, 0, 1, 1], [], []>} : vector<8x256xbf16>, vector<256x256xbf16>, vector<8x256xf32> -> vector<8x256xf32>
    %27 = vector.broadcast %24 : vector<1x256xf32> to vector<8x256xf32>
    %28 = arith.addf %26, %27 : vector<8x256xf32>
    %cst_15 = arith.constant 0.000000e+00 : f32
    %29 = vector.broadcast %cst_15 : f32 to vector<8x256xf32>
    %30 = arith.cmpf ogt, %28, %29 : vector<8x256xf32>
    %cst_16 = arith.constant 0.00999999977 : f32
    %31 = vector.broadcast %cst_16 : f32 to vector<8x256xf32>
    %32 = arith.mulf %31, %28 : vector<8x256xf32>
    %33 = arith.select %30, %28, %32 : vector<8x256xi1>, vector<8x256xf32>
    %c896 = arith.constant 896 : index
    %c0_17 = arith.constant 0 : index
    %34 = vector.load %arg2[%c896, %c0_17] : memref<1664x512xbf16, #tpu.memory_space<vmem>>, vector<256x128xbf16>
    %c3 = arith.constant 3 : index
    %c0_18 = arith.constant 0 : index
    %35 = vector.load %arg3[%c3, %c0_18] : memref<8x512xf32, #tpu.memory_space<vmem>>, vector<1x128xf32>
    %36 = arith.truncf %33 : vector<8x256xf32> to vector<8x256xbf16>
    %cst_19 = arith.constant dense<0.000000e+00> : vector<8x128xf32>
    %37 = tpu.matmul %36, %34, %cst_19 {dimension_numbers = #tpu.dot_dimension_numbers<[1], [0], [0], [1], [0, 0, 1, 1], [], []>} : vector<8x256xbf16>, vector<256x128xbf16>, vector<8x128xf32> -> vector<8x128xf32>
    %38 = vector.broadcast %35 : vector<1x128xf32> to vector<8x128xf32>
    %39 = arith.addf %37, %38 : vector<8x128xf32>
    %cst_20 = arith.constant 0.000000e+00 : f32
    %40 = vector.broadcast %cst_20 : f32 to vector<8x128xf32>
    %41 = arith.cmpf ogt, %39, %40 : vector<8x128xf32>
    %cst_21 = arith.constant 0.00999999977 : f32
    %42 = vector.broadcast %cst_21 : f32 to vector<8x128xf32>
    %43 = arith.mulf %42, %39 : vector<8x128xf32>
    %44 = arith.select %41, %39, %43 : vector<8x128xi1>, vector<8x128xf32>
    %c1152 = arith.constant 1152 : index
    %c0_22 = arith.constant 0 : index
    %45 = vector.load %arg2[%c1152, %c0_22] : memref<1664x512xbf16, #tpu.memory_space<vmem>>, vector<128x128xbf16>
    %c4 = arith.constant 4 : index
    %c0_23 = arith.constant 0 : index
    %46 = vector.load %arg3[%c4, %c0_23] : memref<8x512xf32, #tpu.memory_space<vmem>>, vector<1x128xf32>
    %47 = arith.truncf %44 : vector<8x128xf32> to vector<8x128xbf16>
    %cst_24 = arith.constant dense<0.000000e+00> : vector<8x128xf32>
    %48 = tpu.matmul %47, %45, %cst_24 {dimension_numbers = #tpu.dot_dimension_numbers<[1], [0], [0], [1], [0, 0, 1, 1], [], []>} : vector<8x128xbf16>, vector<128x128xbf16>, vector<8x128xf32> -> vector<8x128xf32>
    %49 = vector.broadcast %46 : vector<1x128xf32> to vector<8x128xf32>
    %50 = arith.addf %48, %49 : vector<8x128xf32>
    %cst_25 = arith.constant 0.000000e+00 : f32
    %51 = vector.broadcast %cst_25 : f32 to vector<8x128xf32>
    %52 = arith.cmpf ogt, %50, %51 : vector<8x128xf32>
    %cst_26 = arith.constant 0.00999999977 : f32
    %53 = vector.broadcast %cst_26 : f32 to vector<8x128xf32>
    %54 = arith.mulf %53, %50 : vector<8x128xf32>
    %55 = arith.select %52, %50, %54 : vector<8x128xi1>, vector<8x128xf32>
    %c1280 = arith.constant 1280 : index
    %c0_27 = arith.constant 0 : index
    %56 = vector.load %arg2[%c1280, %c0_27] : memref<1664x512xbf16, #tpu.memory_space<vmem>>, vector<128x128xbf16>
    %c5 = arith.constant 5 : index
    %c0_28 = arith.constant 0 : index
    %57 = vector.load %arg3[%c5, %c0_28] : memref<8x512xf32, #tpu.memory_space<vmem>>, vector<1x128xf32>
    %58 = arith.truncf %55 : vector<8x128xf32> to vector<8x128xbf16>
    %cst_29 = arith.constant dense<0.000000e+00> : vector<8x128xf32>
    %59 = tpu.matmul %58, %56, %cst_29 {dimension_numbers = #tpu.dot_dimension_numbers<[1], [0], [0], [1], [0, 0, 1, 1], [], []>} : vector<8x128xbf16>, vector<128x128xbf16>, vector<8x128xf32> -> vector<8x128xf32>
    %60 = vector.broadcast %57 : vector<1x128xf32> to vector<8x128xf32>
    %61 = arith.addf %59, %60 : vector<8x128xf32>
    %cst_30 = arith.constant 0.000000e+00 : f32
    %62 = vector.broadcast %cst_30 : f32 to vector<8x128xf32>
    %63 = arith.cmpf ogt, %61, %62 : vector<8x128xf32>
    %cst_31 = arith.constant 0.00999999977 : f32
    %64 = vector.broadcast %cst_31 : f32 to vector<8x128xf32>
    %65 = arith.mulf %64, %61 : vector<8x128xf32>
    %66 = arith.select %63, %61, %65 : vector<8x128xi1>, vector<8x128xf32>
    %c1408 = arith.constant 1408 : index
    %c0_32 = arith.constant 0 : index
    %67 = vector.load %arg2[%c1408, %c0_32] : memref<1664x512xbf16, #tpu.memory_space<vmem>>, vector<128x128xbf16>
    %c6 = arith.constant 6 : index
    %c0_33 = arith.constant 0 : index
    %68 = vector.load %arg3[%c6, %c0_33] : memref<8x512xf32, #tpu.memory_space<vmem>>, vector<1x128xf32>
    %69 = arith.truncf %66 : vector<8x128xf32> to vector<8x128xbf16>
    %cst_34 = arith.constant dense<0.000000e+00> : vector<8x128xf32>
    %70 = tpu.matmul %69, %67, %cst_34 {dimension_numbers = #tpu.dot_dimension_numbers<[1], [0], [0], [1], [0, 0, 1, 1], [], []>} : vector<8x128xbf16>, vector<128x128xbf16>, vector<8x128xf32> -> vector<8x128xf32>
    %71 = vector.broadcast %68 : vector<1x128xf32> to vector<8x128xf32>
    %72 = arith.addf %70, %71 : vector<8x128xf32>
    %cst_35 = arith.constant 0.000000e+00 : f32
    %73 = vector.broadcast %cst_35 : f32 to vector<8x128xf32>
    %74 = arith.cmpf ogt, %72, %73 : vector<8x128xf32>
    %cst_36 = arith.constant 0.00999999977 : f32
    %75 = vector.broadcast %cst_36 : f32 to vector<8x128xf32>
    %76 = arith.mulf %75, %72 : vector<8x128xf32>
    %77 = arith.select %74, %72, %76 : vector<8x128xi1>, vector<8x128xf32>
    %c1536 = arith.constant 1536 : index
    %c0_37 = arith.constant 0 : index
    %78 = vector.load %arg2[%c1536, %c0_37] : memref<1664x512xbf16, #tpu.memory_space<vmem>>, vector<128x128xbf16>
    %c7 = arith.constant 7 : index
    %c0_38 = arith.constant 0 : index
    %79 = vector.load %arg3[%c7, %c0_38] : memref<8x512xf32, #tpu.memory_space<vmem>>, vector<1x128xf32>
    %80 = arith.truncf %77 : vector<8x128xf32> to vector<8x128xbf16>
    %cst_39 = arith.constant dense<0.000000e+00> : vector<8x128xf32>
    %81 = tpu.matmul %80, %78, %cst_39 {dimension_numbers = #tpu.dot_dimension_numbers<[1], [0], [0], [1], [0, 0, 1, 1], [], []>} : vector<8x128xbf16>, vector<128x128xbf16>, vector<8x128xf32> -> vector<8x128xf32>
    %82 = vector.broadcast %79 : vector<1x128xf32> to vector<8x128xf32>
    %83 = arith.addf %81, %82 : vector<8x128xf32>
    %c0_40 = arith.constant 0 : index
    %c0_41 = arith.constant 0 : index
    %84 = vector.load %arg4[%c0_40, %c0_41] : memref<8x128xf32, #tpu.memory_space<vmem>>, vector<8x128xf32>
    tpu.vector_store %arg4[%c0_40, %c0_41], %83 {strides = array<i32>} : memref<8x128xf32, #tpu.memory_space<vmem>>, vector<8x128xf32>,
    return
  }
  func.func @transform_0(%arg0: i32) -> (i32, i32) {
    %c0_i32 = arith.constant 0 : i32
    %c0_i32_0 = arith.constant 0 : i32
    return %arg0, %c0_i32 : i32, i32
  }
  func.func @transform_1(%arg0: i32) -> (i32, i32) {
    %c0_i32 = arith.constant 0 : i32
    %c0_i32_0 = arith.constant 0 : i32
    %c0_i32_1 = arith.constant 0 : i32
    return %c0_i32, %c0_i32_0 : i32, i32
  }
  func.func @transform_2(%arg0: i32) -> (i32, i32) {
    %c0_i32 = arith.constant 0 : i32
    %c0_i32_0 = arith.constant 0 : i32
    %c0_i32_1 = arith.constant 0 : i32
    return %c0_i32, %c0_i32_0 : i32, i32
  }
  func.func @transform_3(%arg0: i32) -> (i32, i32) {
    %c0_i32 = arith.constant 0 : i32
    %c0_i32_0 = arith.constant 0 : i32
    return %arg0, %c0_i32 : i32, i32
  }
}

</mosaic_0001>

<llo_original>
// kernel: tpu_custom_call.1
$region0: #{tpu_custom_call.1}
  #allocation0 [shape = 'u32[]', space=smem, size = 0x4, offset = 0x4, fixed_abs, tag = 'smem constant byte address 0x4 - core index']
  #allocation1 [shape = 'u32[72,128]{1,0:T(1,128)}', space=vmem, size = 0x9000, scoped, tag = 'internal scratch']
  %s0 = inlined_call_operand.hbm [shape: f32[8,128], index: 0, kind: input, shape index: {}]
  %s1 = inlined_call_operand.hbm [shape: bf16[1664,512], index: 1, kind: input, shape index: {}]
  %s2 = inlined_call_operand.hbm [shape: f32[8,512], index: 2, kind: input, shape index: {}]
  %s3 = inlined_call_operand.hbm [shape: f32[8,128], index: 3, kind: output, shape index: {}]
  %s4 = sld [smem:[#allocation0]]
  $region34: #{tpu_custom_call.1} parent=0
    _
  %s6 = ssub.s32 1, %s4
  %s7 = scalar_select 0, %s6, %s4
  $region1: #{tpu_custom_call.1} parent=0
    #allocation2 [shape = 'u8[4096]{0}', space=vmem, size = 0x1000, scoped, tag = 'input window, operand 0, single buffered']
    #allocation3 [shape = 's32[1]{0}', space=sflag, size = 0x4, scoped, tag = 'scoped memory for tpu_custom_call.1']
    #allocation4 [shape = 's32[1]{0}', space=sflag, size = 0x4, scoped, tag = 'scoped memory for tpu_custom_call.1']
    #allocation5 [shape = 'u8[1703936]{0}', space=vmem, size = 0x1a0000, scoped, tag = 'input window, operand 1, single buffered']
    #allocation6 [shape = 's32[1]{0}', space=sflag, size = 0x4, scoped, tag = 'scoped memory for tpu_custom_call.1']
    #allocation7 [shape = 'u8[16384]{0}', space=vmem, size = 0x4000, scoped, tag = 'input window, operand 2, single buffered']
    #allocation8 [shape = 'u8[4096]{0}', space=vmem, size = 0x1000, scoped, tag = 'output window, operand 0, single buffered']
    %8 = vsyncpa [#allocation3], 0
    %9 = vsyncpa [#allocation6], 0
    %10 = vsyncpa [#allocation4], 0
    // Predicated region
    $region2: #{tpu_custom_call.1} parent=1 // pred_check
      _
    $region3: #{tpu_custom_call.1} parent=1 // pred_check_branch
      %12 = sbr.rel (0) target = $region5
    $region4: #{tpu_custom_call.1} parent=1 // pred_region
      %14 = vsyncadd [#allocation3], 0
      %s16 = sshll.u32 %s0, 4
      %s17 = int_to_ptr.hbm [resolvable:$true] %s16
      %s18 = sshll.u32 [#allocation2], 4
      %s19 = int_to_ptr.vmem [resolvable:$true] %s18
      %21 = dma.hbm_to_vmem [thread:$0]  %s17, 128, %s19, [#allocation3]
    $region5: #{tpu_custom_call.1} parent=1 // pred_fallthru
      _
    // Predicated region
    $region6: #{tpu_custom_call.1} parent=1 // pred_check
      _
    $region7: #{tpu_custom_call.1} parent=1 // pred_check_branch
      %23 = sbr.rel (0) target = $region9
    $region8: #{tpu_custom_call.1} parent=1 // pred_region
      %25 = vsyncadd [#allocation6], 0
      %s26 = sshll.u32 %s1, 4
      %s27 = int_to_ptr.hbm [resolvable:$true] %s26
      %s28 = sshll.u32 [#allocation5], 4
      %s29 = int_to_ptr.vmem [resolvable:$true] %s28
      %34 = dma.hbm_to_vmem [thread:$0]  %s27, 53248, %s29, [#allocation6], 256, 256, 16
    $region9: #{tpu_custom_call.1} parent=1 // pred_fallthru
      _
    // Predicated region
    $region10: #{tpu_custom_call.1} parent=1 // pred_check
      _
    $region11: #{tpu_custom_call.1} parent=1 // pred_check_branch
      %36 = sbr.rel (0) target = $region13
    $region12: #{tpu_custom_call.1} parent=1 // pred_region
      %38 = vsyncadd [#allocation6], 0
      %s40 = sshll.u32 %s2, 4
      %s41 = int_to_ptr.hbm [resolvable:$true] %s40
      %s42 = sshll.u32 [#allocation7], 4
      %s43 = int_to_ptr.vmem [resolvable:$true] %s42
      %45 = dma.hbm_to_vmem [thread:$0]  %s41, 512, %s43, [#allocation6]
    $region13: #{tpu_custom_call.1} parent=1 // pred_fallthru
      _
    // Predicated region
    $region14: #{tpu_custom_call.1} parent=1 // pred_check
      _
    $region15: #{tpu_custom_call.1} parent=1 // pred_check_branch
      %47 = sbr.rel (0) target = $region17
    $region16: #{tpu_custom_call.1} parent=1 // pred_region
      %49 = dma.done [#allocation3], 128
    $region17: #{tpu_custom_call.1} parent=1 // pred_fallthru
      _
    // Predicated region
    $region18: #{tpu_custom_call.1} parent=1 // pred_check
      _
    $region19: #{tpu_custom_call.1} parent=1 // pred_check_branch
      %51 = sbr.rel (0) target = $region21
    $region20: #{tpu_custom_call.1} parent=1 // pred_region
      %53 = dma.done [#allocation6], 53248
    $region21: #{tpu_custom_call.1} parent=1 // pred_fallthru
      _
    // Predicated region
    $region22: #{tpu_custom_call.1} parent=1 // pred_check
      _
    $region23: #{tpu_custom_call.1} parent=1 // pred_check_branch
      %55 = sbr.rel (0) target = $region25
    $region24: #{tpu_custom_call.1} parent=1 // pred_region
      %57 = dma.done [#allocation6], 512
    $region25: #{tpu_custom_call.1} parent=1 // pred_fallthru
      _
    %v58 = vld [vmem:[#allocation2] sm:$0xff]
    %v59 = vld [vmem:[#allocation5] sm:$0xff]
    %v60 = vld [vmem:[#allocation5 + $0x8] sm:$0xff]
    %v61 = vld [vmem:[#allocation5 + $0x10] sm:$0xff]
    %v62 = vld [vmem:[#allocation5 + $0x18] sm:$0xff]
    %v63 = vld [vmem:[#allocation5 + $0x20] sm:$0xff]
    %v64 = vld [vmem:[#allocation5 + $0x28] sm:$0xff]
    %v65 = vld [vmem:[#allocation5 + $0x30] sm:$0xff]
    %v66 = vld [vmem:[#allocation5 + $0x38] sm:$0xff]
    %v67 = vld [vmem:[#allocation5 + $0x40] sm:$0xff]
    %v68 = vld [vmem:[#allocation5 + $0x48] sm:$0xff]
    %v69 = vld [vmem:[#allocation5 + $0x50] sm:$0xff]
    %v70 = vld [vmem:[#allocation5 + $0x58] sm:$0xff]
    %v71 = vld [vmem:[#allocation5 + $0x60] sm:$0xff]
    %v72 = vld [vmem:[#allocation5 + $0x68] sm:$0xff]
    %v73 = vld [vmem:[#allocation5 + $0x70] sm:$0xff]
    %v74 = vld [vmem:[#allocation5 + $0x78] sm:$0xff]
    %v75 = vld [vmem:[#allocation5 + $0x80] sm:$0xff]
    %v76 = vld [vmem:[#allocation5 + $0x88] sm:$0xff]
    %v77 = vld [vmem:[#allocation5 + $0x90] sm:$0xff]
    %v78 = vld [vmem:[#allocation5 + $0x98] sm:$0xff]
    %v79 = vld [vmem:[#allocation5 + $0xa0] sm:$0xff]
    %v80 = vld [vmem:[#allocation5 + $0xa8] sm:$0xff]
    %v81 = vld [vmem:[#allocation5 + $0xb0] sm:$0xff]
    %v82 = vld [vmem:[#allocation5 + $0xb8] sm:$0xff]
    %v83 = vld [vmem:[#allocation5 + $0xc0] sm:$0xff]
    %v84 = vld [vmem:[#allocation5 + $0xc8] sm:$0xff]
    %v85 = vld [vmem:[#allocation5 + $0xd0] sm:$0xff]
    %v86 = vld [vmem:[#allocation5 + $0xd8] sm:$0xff]
    %v87 = vld [vmem:[#allocation5 + $0xe0] sm:$0xff]
    %v88 = vld [vmem:[#allocation5 + $0xe8] sm:$0xff]
    %v89 = vld [vmem:[#allocation5 + $0xf0] sm:$0xff]
    %v90 = vld [vmem:[#allocation5 + $0xf8] sm:$0xff]
    %v91 = vld [vmem:[#allocation7] ss:$8 sm:$0xf]
    %v92 = vpack.c.bf16 %v58, %v58
    %v94 = vperm.slane %v91, 0
    %v95 = vperm.slane %v91, 1
    %v96 = vperm.slane %v91, 2
    %v97 = vperm.slane %v91, 3
    %v134 = vunpack.c.l.b16 %v59
    %v135 = vunpack.c.h.b16 %v59
    %v136 = vunpack.c.l.b16 %v60
    %v137 = vunpack.c.h.b16 %v60
    %v138 = vunpack.c.l.b16 %v61
    %v139 = vunpack.c.h.b16 %v61
    %v140 = vunpack.c.l.b16 %v62
    %v141 = vunpack.c.h.b16 %v62
    %v142 = vunpack.c.l.b16 %v63
    %v143 = vunpack.c.h.b16 %v63
    %v144 = vunpack.c.l.b16 %v64
    %v145 = vunpack.c.h.b16 %v64
    %v146 = vunpack.c.l.b16 %v65
    %v147 = vunpack.c.h.b16 %v65
    %v148 = vunpack.c.l.b16 %v66
    %v149 = vunpack.c.h.b16 %v66
    %v150 = vunpack.c.l.b16 %v67
    %v151 = vunpack.c.h.b16 %v67
    %v152 = vunpack.c.l.b16 %v68
    %v153 = vunpack.c.h.b16 %v68
    %v154 = vunpack.c.l.b16 %v69
    %v155 = vunpack.c.h.b16 %v69
    %v156 = vunpack.c.l.b16 %v70
    %v157 = vunpack.c.h.b16 %v70
    %v158 = vunpack.c.l.b16 %v71
    %v159 = vunpack.c.h.b16 %v71
    %v160 = vunpack.c.l.b16 %v72
    %v161 = vunpack.c.h.b16 %v72
    %v162 = vunpack.c.l.b16 %v73
    %v163 = vunpack.c.h.b16 %v73
    %v164 = vunpack.c.l.b16 %v74
    %v165 = vunpack.c.h.b16 %v74
    %v166 = vunpack.c.l.b16 %v75
    %v167 = vunpack.c.h.b16 %v75
    %v168 = vunpack.c.l.b16 %v76
    %v169 = vunpack.c.h.b16 %v76
    %v170 = vunpack.c.l.b16 %v77
    %v171 = vunpack.c.h.b16 %v77
    %v172 = vunpack.c.l.b16 %v78
    %v173 = vunpack.c.h.b16 %v78
    %v174 = vunpack.c.l.b16 %v79
    %v175 = vunpack.c.h.b16 %v79
    %v176 = vunpack.c.l.b16 %v80
    %v177 = vunpack.c.h.b16 %v80
    %v178 = vunpack.c.l.b16 %v81
    %v179 = vunpack.c.h.b16 %v81
    %v180 = vunpack.c.l.b16 %v82
    %v181 = vunpack.c.h.b16 %v82
    %v182 = vunpack.c.l.b16 %v83
    %v183 = vunpack.c.h.b16 %v83
    %v184 = vunpack.c.l.b16 %v84
    %v185 = vunpack.c.h.b16 %v84
    %v186 = vunpack.c.l.b16 %v85
    %v187 = vunpack.c.h.b16 %v85
    %v188 = vunpack.c.l.b16 %v86
    %v189 = vunpack.c.h.b16 %v86
    %v190 = vunpack.c.l.b16 %v87
    %v191 = vunpack.c.h.b16 %v87
    %v192 = vunpack.c.l.b16 %v88
    %v193 = vunpack.c.h.b16 %v88
    %v194 = vunpack.c.l.b16 %v89
    %v195 = vunpack.c.h.b16 %v89
    %v196 = vunpack.c.l.b16 %v90
    %v197 = vunpack.c.h.b16 %v90
    %v198 = vpack.c.b16 %v138, %v134
    %v199 = vpack.c.b16 %v139, %v135
    %v200 = vpack.c.b16 %v140, %v136
    %v201 = vpack.c.b16 %v141, %v137
    %v202 = vpack.c.b16 %v146, %v142
    %v203 = vpack.c.b16 %v147, %v143
    %v204 = vpack.c.b16 %v148, %v144
    %v205 = vpack.c.b16 %v149, %v145
    %v206 = vpack.c.b16 %v154, %v150
    %v207 = vpack.c.b16 %v155, %v151
    %v208 = vpack.c.b16 %v156, %v152
    %v209 = vpack.c.b16 %v157, %v153
    %v210 = vpack.c.b16 %v162, %v158
    %v211 = vpack.c.b16 %v163, %v159
    %v212 = vpack.c.b16 %v164, %v160
    %v213 = vpack.c.b16 %v165, %v161
    %v214 = vpack.c.b16 %v170, %v166
    %v215 = vpack.c.b16 %v171, %v167
    %v216 = vpack.c.b16 %v172, %v168
    %v217 = vpack.c.b16 %v173, %v169
    %v218 = vpack.c.b16 %v178, %v174
    %v219 = vpack.c.b16 %v179, %v175
    %v220 = vpack.c.b16 %v180, %v176
    %v221 = vpack.c.b16 %v181, %v177
    %v222 = vpack.c.b16 %v186, %v182
    %v223 = vpack.c.b16 %v187, %v183
    %v224 = vpack.c.b16 %v188, %v184
    %v225 = vpack.c.b16 %v189, %v185
    %v226 = vpack.c.b16 %v194, %v190
    %v227 = vpack.c.b16 %v195, %v191
    %v228 = vpack.c.b16 %v196, %v192
    %v229 = vpack.c.b16 %v197, %v193
    %262 = vmatpush.bf16.msra.mxu0 %v226
    %263 = vmatpush.bf16.msra.mxu0 %v222
    %264 = vmatpush.bf16.msra.mxu0 %v218
    %265 = vmatpush.bf16.msra.mxu0 %v214
    %266 = vmatpush.bf16.msra.mxu0 %v210
    %267 = vmatpush.bf16.msra.mxu0 %v206
    %268 = vmatpush.bf16.msra.mxu0 %v202
    %269 = vmatpush.bf16.msra.mxu0 %v198
    %270 = vmatmul.bf16.gmra.mxu0 %v92
    %v271 = vpop.f32.mrf.mxu0
    %v272 = vadd.f32 %v94, %v271
    %v273 = vpop.f32.mrf.mxu0
    %274 = vdwg.mxu0
    %275 = vmatpush.bf16.msra.mxu0 %v227
    %276 = vmatpush.bf16.msra.mxu0 %v223
    %277 = vmatpush.bf16.msra.mxu0 %v219
    %278 = vmatpush.bf16.msra.mxu0 %v215
    %279 = vmatpush.bf16.msra.mxu0 %v211
    %280 = vmatpush.bf16.msra.mxu0 %v207
    %281 = vmatpush.bf16.msra.mxu0 %v203
    %282 = vmatpush.bf16.msra.mxu0 %v199
    %283 = vmatmul.bf16.gmra.mxu0 %v92
    %v284 = vpop.f32.mrf.mxu0
    %v285 = vadd.f32 %v95, %v284
    %v286 = vpop.f32.mrf.mxu0
    %287 = vdwg.mxu0
    %288 = vmatpush.bf16.msra.mxu0 %v228
    %289 = vmatpush.bf16.msra.mxu0 %v224
    %290 = vmatpush.bf16.msra.mxu0 %v220
    %291 = vmatpush.bf16.msra.mxu0 %v216
    %292 = vmatpush.bf16.msra.mxu0 %v212
    %293 = vmatpush.bf16.msra.mxu0 %v208
    %294 = vmatpush.bf16.msra.mxu0 %v204
    %295 = vmatpush.bf16.msra.mxu0 %v200
    %296 = vmatmul.bf16.gmra.mxu0 %v92
    %v297 = vpop.f32.mrf.mxu0
    %v298 = vadd.f32 %v96, %v297
    %v299 = vpop.f32.mrf.mxu0
    %300 = vdwg.mxu0
    %301 = vmatpush.bf16.msra.mxu0 %v229
    %302 = vmatpush.bf16.msra.mxu0 %v225
    %303 = vmatpush.bf16.msra.mxu0 %v221
    %304 = vmatpush.bf16.msra.mxu0 %v217
    %305 = vmatpush.bf16.msra.mxu0 %v213
    %306 = vmatpush.bf16.msra.mxu0 %v209
    %307 = vmatpush.bf16.msra.mxu0 %v205
    %308 = vmatpush.bf16.msra.mxu0 %v201
    %309 = vmatmul.bf16.gmra.mxu0 %v92
    %v310 = vpop.f32.mrf.mxu0
    %v311 = vadd.f32 %v97, %v310
    %v312 = vpop.f32.mrf.mxu0
    %313 = vdwg.mxu0
    %vm314 = vcmp.gt.f32.partialorder %v272, 0.0
    %vm315 = vcmp.gt.f32.partialorder %v285, 0.0
    %vm316 = vcmp.gt.f32.partialorder %v298, 0.0
    %vm317 = vcmp.gt.f32.partialorder %v311, 0.0
    %v318 = vmul.f32 %v272, 0.01
    %v319 = vmul.f32 %v285, 0.01
    %v320 = vmul.f32 %v298, 0.01
    %v321 = vmul.f32 %v311, 0.01
    %v322 = vsel %vm314, %v272, %v318
    %v323 = vsel %vm315, %v285, %v319
    %v324 = vsel %vm316, %v298, %v320
    %v325 = vsel %vm317, %v311, %v321
    %v326 = vld [vmem:[#allocation5 + $0x100] sm:$0xff]
    %v327 = vld [vmem:[#allocation5 + $0x110] sm:$0xff]
    %v328 = vld [vmem:[#allocation5 + $0x120] sm:$0xff]
    %v329 = vld [vmem:[#allocation5 + $0x130] sm:$0xff]
    %v330 = vld [vmem:[#allocation5 + $0x140] sm:$0xff]
    %v331 = vld [vmem:[#allocation5 + $0x150] sm:$0xff]
    %v332 = vld [vmem:[#allocation5 + $0x160] sm:$0xff]
    %v333 = vld [vmem:[#allocation5 + $0x170] sm:$0xff]
    %v334 = vld [vmem:[#allocation5 + $0x180] sm:$0xff]
    %v335 = vld [vmem:[#allocation5 + $0x190] sm:$0xff]
    %v336 = vld [vmem:[#allocation5 + $0x1a0] sm:$0xff]
    %v337 = vld [vmem:[#allocation5 + $0x1b0] sm:$0xff]
    %v338 = vld [vmem:[#allocation5 + $0x1c0] sm:$0xff]
    %v339 = vld [vmem:[#allocation5 + $0x1d0] sm:$0xff]
    %v340 = vld [vmem:[#allocation5 + $0x1e0] sm:$0xff]
    %v341 = vld [vmem:[#allocation5 + $0x1f0] sm:$0xff]
    %v342 = vld [vmem:[#allocation5 + $0x200] sm:$0xff]
    %v343 = vld [vmem:[#allocation5 + $0x210] sm:$0xff]
    %v344 = vld [vmem:[#allocation5 + $0x220] sm:$0xff]
    %v345 = vld [vmem:[#allocation5 + $0x230] sm:$0xff]
    %v346 = vld [vmem:[#allocation5 + $0x240] sm:$0xff]
    %v347 = vld [vmem:[#allocation5 + $0x250] sm:$0xff]
    %v348 = vld [vmem:[#allocation5 + $0x260] sm:$0xff]
    %v349 = vld [vmem:[#allocation5 + $0x270] sm:$0xff]
    %v350 = vld [vmem:[#allocation5 + $0x280] sm:$0xff]
    %v351 = vld [vmem:[#allocation5 + $0x290] sm:$0xff]
    %v352 = vld [vmem:[#allocation5 + $0x2a0] sm:$0xff]
    %v353 = vld [vmem:[#allocation5 + $0x2b0] sm:$0xff]
    %v354 = vld [vmem:[#allocation5 + $0x2c0] sm:$0xff]
    %v355 = vld [vmem:[#allocation5 + $0x2d0] sm:$0xff]
    %v356 = vld [vmem:[#allocation5 + $0x2e0] sm:$0xff]
    %v357 = vld [vmem:[#allocation5 + $0x2f0] sm:$0xff]
    %v358 = vld [vmem:[#allocation5 + $0x300] sm:$0xff]
    %v359 = vld [vmem:[#allocation5 + $0x310] sm:$0xff]
    %v360 = vld [vmem:[#allocation5 + $0x320] sm:$0xff]
    %v361 = vld [vmem:[#allocation5 + $0x330] sm:$0xff]
    %v362 = vld [vmem:[#allocation5 + $0x340] sm:$0xff]
    %v363 = vld [vmem:[#allocation5 + $0x350] sm:$0xff]
    %v364 = vld [vmem:[#allocation5 + $0x360] sm:$0xff]
    %v365 = vld [vmem:[#allocation5 + $0x370] sm:$0xff]
    %v366 = vld [vmem:[#allocation5 + $0x380] sm:$0xff]
    %v367 = vld [vmem:[#allocation5 + $0x390] sm:$0xff]
    %v368 = vld [vmem:[#allocation5 + $0x3a0] sm:$0xff]
    %v369 = vld [vmem:[#allocation5 + $0x3b0] sm:$0xff]
    %v370 = vld [vmem:[#allocation5 + $0x3c0] sm:$0xff]
    %v371 = vld [vmem:[#allocation5 + $0x3d0] sm:$0xff]
    %v372 = vld [vmem:[#allocation5 + $0x3e0] sm:$0xff]
    %v373 = vld [vmem:[#allocation5 + $0x3f0] sm:$0xff]
    %v374 = vld [vmem:[#allocation5 + $0x400] sm:$0xff]
    %v375 = vld [vmem:[#allocation5 + $0x410] sm:$0xff]
    %v376 = vld [vmem:[#allocation5 + $0x420] sm:$0xff]
    %v377 = vld [vmem:[#allocation5 + $0x430] sm:$0xff]
    %v378 = vld [vmem:[#allocation5 + $0x440] sm:$0xff]
    %v379 = vld [vmem:[#allocation5 + $0x450] sm:$0xff]
    %v380 = vld [vmem:[#allocation5 + $0x460] sm:$0xff]
    %v381 = vld [vmem:[#allocation5 + $0x470] sm:$0xff]
    %v382 = vld [vmem:[#allocation5 + $0x480] sm:$0xff]
    %v383 = vld [vmem:[#allocation5 + $0x490] sm:$0xff]
    %v384 = vld [vmem:[#allocation5 + $0x4a0] sm:$0xff]
    %v385 = vld [vmem:[#allocation5 + $0x4b0] sm:$0xff]
    %v386 = vld [vmem:[#allocation5 + $0x4c0] sm:$0xff]
    %v387 = vld [vmem:[#allocation5 + $0x4d0] sm:$0xff]
    %v388 = vld [vmem:[#allocation5 + $0x4e0] sm:$0xff]
    %v389 = vld [vmem:[#allocation5 + $0x4f0] sm:$0xff]
    %s390 = scalar_lea.vmem [#allocation7], 1
    %v391 = vld [vmem:[%s390] ss:$8 sm:$0x3]
    %v392 = vpack.c.bf16 %v322, %v322
    %v393 = vpack.c.bf16 %v323, %v323
    %v394 = vpack.c.bf16 %v324, %v324
    %v395 = vpack.c.bf16 %v325, %v325
    %v397 = vperm.slane %v391, 0
    %v398 = vperm.slane %v391, 1
    %v465 = vunpack.c.l.b16 %v326
    %v466 = vunpack.c.h.b16 %v326
    %v467 = vunpack.c.l.b16 %v327
    %v468 = vunpack.c.h.b16 %v327
    %v469 = vunpack.c.l.b16 %v328
    %v470 = vunpack.c.h.b16 %v328
    %v471 = vunpack.c.l.b16 %v329
    %v472 = vunpack.c.h.b16 %v329
    %v473 = vunpack.c.l.b16 %v330
    %v474 = vunpack.c.h.b16 %v330
    %v475 = vunpack.c.l.b16 %v331
    %v476 = vunpack.c.h.b16 %v331
    %v477 = vunpack.c.l.b16 %v332
    %v478 = vunpack.c.h.b16 %v332
    %v479 = vunpack.c.l.b16 %v333
    %v480 = vunpack.c.h.b16 %v333
    %v481 = vunpack.c.l.b16 %v334
    %v482 = vunpack.c.h.b16 %v334
    %v483 = vunpack.c.l.b16 %v335
    %v484 = vunpack.c.h.b16 %v335
    %v485 = vunpack.c.l.b16 %v336
    %v486 = vunpack.c.h.b16 %v336
    %v487 = vunpack.c.l.b16 %v337
    %v488 = vunpack.c.h.b16 %v337
    %v489 = vunpack.c.l.b16 %v338
    %v490 = vunpack.c.h.b16 %v338
    %v491 = vunpack.c.l.b16 %v339
    %v492 = vunpack.c.h.b16 %v339
    %v493 = vunpack.c.l.b16 %v340
    %v494 = vunpack.c.h.b16 %v340
    %v495 = vunpack.c.l.b16 %v341
    %v496 = vunpack.c.h.b16 %v341
    %v497 = vunpack.c.l.b16 %v342
    %v498 = vunpack.c.h.b16 %v342
    %v499 = vunpack.c.l.b16 %v343
    %v500 = vunpack.c.h.b16 %v343
    %v501 = vunpack.c.l.b16 %v344
    %v502 = vunpack.c.h.b16 %v344
    %v503 = vunpack.c.l.b16 %v345
    %v504 = vunpack.c.h.b16 %v345
    %v505 = vunpack.c.l.b16 %v346
    %v506 = vunpack.c.h.b16 %v346
    %v507 = vunpack.c.l.b16 %v347
    %v508 = vunpack.c.h.b16 %v347
    %v509 = vunpack.c.l.b16 %v348
    %v510 = vunpack.c.h.b16 %v348
    %v511 = vunpack.c.l.b16 %v349
    %v512 = vunpack.c.h.b16 %v349
    %v513 = vunpack.c.l.b16 %v350
    %v514 = vunpack.c.h.b16 %v350
    %v515 = vunpack.c.l.b16 %v351
    %v516 = vunpack.c.h.b16 %v351
    %v517 = vunpack.c.l.b16 %v352
    %v518 = vunpack.c.h.b16 %v352
    %v519 = vunpack.c.l.b16 %v353
    %v520 = vunpack.c.h.b16 %v353
    %v521 = vunpack.c.l.b16 %v354
    %v522 = vunpack.c.h.b16 %v354
    %v523 = vunpack.c.l.b16 %v355
    %v524 = vunpack.c.h.b16 %v355
    %v525 = vunpack.c.l.b16 %v356
    %v526 = vunpack.c.h.b16 %v356
    %v527 = vunpack.c.l.b16 %v357
    %v528 = vunpack.c.h.b16 %v357
    %v529 = vunpack.c.l.b16 %v358
    %v530 = vunpack.c.h.b16 %v358
    %v531 = vunpack.c.l.b16 %v359
    %v532 = vunpack.c.h.b16 %v359
    %v533 = vunpack.c.l.b16 %v360
    %v534 = vunpack.c.h.b16 %v360
    %v535 = vunpack.c.l.b16 %v361
    %v536 = vunpack.c.h.b16 %v361
    %v537 = vunpack.c.l.b16 %v362
    %v538 = vunpack.c.h.b16 %v362
    %v539 = vunpack.c.l.b16 %v363
    %v540 = vunpack.c.h.b16 %v363
    %v541 = vunpack.c.l.b16 %v364
    %v542 = vunpack.c.h.b16 %v364
    %v543 = vunpack.c.l.b16 %v365
    %v544 = vunpack.c.h.b16 %v365
    %v545 = vunpack.c.l.b16 %v366
    %v546 = vunpack.c.h.b16 %v366
    %v547 = vunpack.c.l.b16 %v367
    %v548 = vunpack.c.h.b16 %v367
    %v549 = vunpack.c.l.b16 %v368
    %v550 = vunpack.c.h.b16 %v368
    %v551 = vunpack.c.l.b16 %v369
    %v552 = vunpack.c.h.b16 %v369
    %v553 = vunpack.c.l.b16 %v370
    %v554 = vunpack.c.h.b16 %v370
    %v555 = vunpack.c.l.b16 %v371
    %v556 = vunpack.c.h.b16 %v371
    %v557 = vunpack.c.l.b16 %v372
    %v558 = vunpack.c.h.b16 %v372
    %v559 = vunpack.c.l.b16 %v373
    %v560 = vunpack.c.h.b16 %v373
    %v561 = vunpack.c.l.b16 %v374
    %v562 = vunpack.c.h.b16 %v374
    %v563 = vunpack.c.l.b16 %v375
    %v564 = vunpack.c.h.b16 %v375
    %v565 = vunpack.c.l.b16 %v376
    %v566 = vunpack.c.h.b16 %v376
    %v567 = vunpack.c.l.b16 %v377
    %v568 = vunpack.c.h.b16 %v377
    %v569 = vunpack.c.l.b16 %v378
    %v570 = vunpack.c.h.b16 %v378
    %v571 = vunpack.c.l.b16 %v379
    %v572 = vunpack.c.h.b16 %v379
    %v573 = vunpack.c.l.b16 %v380
    %v574 = vunpack.c.h.b16 %v380
    %v575 = vunpack.c.l.b16 %v381
    %v576 = vunpack.c.h.b16 %v381
    %v577 = vunpack.c.l.b16 %v382
    %v578 = vunpack.c.h.b16 %v382
    %v579 = vunpack.c.l.b16 %v383
    %v580 = vunpack.c.h.b16 %v383
    %v581 = vunpack.c.l.b16 %v384
    %v582 = vunpack.c.h.b16 %v384
    %v583 = vunpack.c.l.b16 %v385
    %v584 = vunpack.c.h.b16 %v385
    %v585 = vunpack.c.l.b16 %v386
    %v586 = vunpack.c.h.b16 %v386
    %v587 = vunpack.c.l.b16 %v387
    %v588 = vunpack.c.h.b16 %v387
    %v589 = vunpack.c.l.b16 %v388
    %v590 = vunpack.c.h.b16 %v388
    %v591 = vunpack.c.l.b16 %v389
    %v592 = vunpack.c.h.b16 %v389
    %v593 = vpack.c.b16 %v467, %v465
    %v594 = vpack.c.b16 %v468, %v466
    %v595 = vpack.c.b16 %v471, %v469
    %v596 = vpack.c.b16 %v472, %v470
    %v597 = vpack.c.b16 %v475, %v473
    %v598 = vpack.c.b16 %v476, %v474
    %v599 = vpack.c.b16 %v479, %v477
    %v600 = vpack.c.b16 %v480, %v478
    %v601 = vpack.c.b16 %v483, %v481
    %v602 = vpack.c.b16 %v484, %v482
    %v603 = vpack.c.b16 %v487, %v485
    %v604 = vpack.c.b16 %v488, %v486
    %v605 = vpack.c.b16 %v491, %v489
    %v606 = vpack.c.b16 %v492, %v490
    %v607 = vpack.c.b16 %v495, %v493
    %v608 = vpack.c.b16 %v496, %v494
    %v609 = vpack.c.b16 %v499, %v497
    %v610 = vpack.c.b16 %v500, %v498
    %v611 = vpack.c.b16 %v503, %v501
    %v612 = vpack.c.b16 %v504, %v502
    %v613 = vpack.c.b16 %v507, %v505
    %v614 = vpack.c.b16 %v508, %v506
    %v615 = vpack.c.b16 %v511, %v509
    %v616 = vpack.c.b16 %v512, %v510
    %v617 = vpack.c.b16 %v515, %v513
    %v618 = vpack.c.b16 %v516, %v514
    %v619 = vpack.c.b16 %v519, %v517
    %v620 = vpack.c.b16 %v520, %v518
    %v621 = vpack.c.b16 %v523, %v521
    %v622 = vpack.c.b16 %v524, %v522
    %v623 = vpack.c.b16 %v527, %v525
    %v624 = vpack.c.b16 %v528, %v526
    %v625 = vpack.c.b16 %v531, %v529
    %v626 = vpack.c.b16 %v532, %v530
    %v627 = vpack.c.b16 %v535, %v533
    %v628 = vpack.c.b16 %v536, %v534
    %v629 = vpack.c.b16 %v539, %v537
    %v630 = vpack.c.b16 %v540, %v538
    %v631 = vpack.c.b16 %v543, %v541
    %v632 = vpack.c.b16 %v544, %v542
    %v633 = vpack.c.b16 %v547, %v545
    %v634 = vpack.c.b16 %v548, %v546
    %v635 = vpack.c.b16 %v551, %v549
    %v636 = vpack.c.b16 %v552, %v550
    %v637 = vpack.c.b16 %v555, %v553
    %v638 = vpack.c.b16 %v556, %v554
    %v639 = vpack.c.b16 %v559, %v557
    %v640 = vpack.c.b16 %v560, %v558
    %v641 = vpack.c.b16 %v563, %v561
    %v642 = vpack.c.b16 %v564, %v562
    %v643 = vpack.c.b16 %v567, %v565
    %v644 = vpack.c.b16 %v568, %v566
    %v645 = vpack.c.b16 %v571, %v569
    %v646 = vpack.c.b16 %v572, %v570
    %v647 = vpack.c.b16 %v575, %v573
    %v648 = vpack.c.b16 %v576, %v574
    %v649 = vpack.c.b16 %v579, %v577
    %v650 = vpack.c.b16 %v580, %v578
    %v651 = vpack.c.b16 %v583, %v581
    %v652 = vpack.c.b16 %v584, %v582
    %v653 = vpack.c.b16 %v587, %v585
    %v654 = vpack.c.b16 %v588, %v586
    %v655 = vpack.c.b16 %v591, %v589
    %v656 = vpack.c.b16 %v592, %v590
    %721 = vmatpush.bf16.msra.mxu0 %v607
    %722 = vmatpush.bf16.msra.mxu0 %v605
    %723 = vmatpush.bf16.msra.mxu0 %v603
    %724 = vmatpush.bf16.msra.mxu0 %v601
    %725 = vmatpush.bf16.msra.mxu0 %v599
    %726 = vmatpush.bf16.msra.mxu0 %v597
    %727 = vmatpush.bf16.msra.mxu0 %v595
    %728 = vmatpush.bf16.msra.mxu0 %v593
    %729 = vmatmul.bf16.gmra.mxu0 %v392
    %v730 = vpop.f32.mrf.mxu0
    %v731 = vadd.f32 %v397, %v730
    %v732 = vpop.f32.mrf.mxu0
    %733 = vdwg.mxu0
    %734 = vmatpush.bf16.msra.mxu0 %v623
    %735 = vmatpush.bf16.msra.mxu0 %v621
    %736 = vmatpush.bf16.msra.mxu0 %v619
    %737 = vmatpush.bf16.msra.mxu0 %v617
    %738 = vmatpush.bf16.msra.mxu0 %v615
    %739 = vmatpush.bf16.msra.mxu0 %v613
    %740 = vmatpush.bf16.msra.mxu0 %v611
    %741 = vmatpush.bf16.msra.mxu0 %v609
    %742 = vmatmul.bf16.gmra.mxu0 %v393
    %v743 = vpop.f32.mrf.mxu0
    %v744 = vadd.f32 %v731, %v743
    %v745 = vpop.f32.mrf.mxu0
    %746 = vdwg.mxu0
    %747 = vmatpush.bf16.msra.mxu0 %v639
    %748 = vmatpush.bf16.msra.mxu0 %v637
    %749 = vmatpush.bf16.msra.mxu0 %v635
    %750 = vmatpush.bf16.msra.mxu0 %v633
    %751 = vmatpush.bf16.msra.mxu0 %v631
    %752 = vmatpush.bf16.msra.mxu0 %v629
    %753 = vmatpush.bf16.msra.mxu0 %v627
    %754 = vmatpush.bf16.msra.mxu0 %v625
    %755 = vmatmul.bf16.gmra.mxu0 %v394
    %v756 = vpop.f32.mrf.mxu0
    %v757 = vadd.f32 %v744, %v756
    %v758 = vpop.f32.mrf.mxu0
    %759 = vdwg.mxu0
    %760 = vmatpush.bf16.msra.mxu0 %v655
    %761 = vmatpush.bf16.msra.mxu0 %v653
    %762 = vmatpush.bf16.msra.mxu0 %v651
    %763 = vmatpush.bf16.msra.mxu0 %v649
    %764 = vmatpush.bf16.msra.mxu0 %v647
    %765 = vmatpush.bf16.msra.mxu0 %v645
    %766 = vmatpush.bf16.msra.mxu0 %v643
    %767 = vmatpush.bf16.msra.mxu0 %v641
    %768 = vmatmul.bf16.gmra.mxu0 %v395
    %v769 = vpop.f32.mrf.mxu0
    %v770 = vadd.f32 %v757, %v769
    %v771 = vpop.f32.mrf.mxu0
    %772 = vdwg.mxu0
    %773 = vmatpush.bf16.msra.mxu0 %v608
    %774 = vmatpush.bf16.msra.mxu0 %v606
    %775 = vmatpush.bf16.msra.mxu0 %v604
    %776 = vmatpush.bf16.msra.mxu0 %v602
    %777 = vmatpush.bf16.msra.mxu0 %v600
    %778 = vmatpush.bf16.msra.mxu0 %v598
    %779 = vmatpush.bf16.msra.mxu0 %v596
    %780 = vmatpush.bf16.msra.mxu0 %v594
    %781 = vmatmul.bf16.gmra.mxu0 %v392
    %v782 = vpop.f32.mrf.mxu0
    %v783 = vadd.f32 %v398, %v782
    %v784 = vpop.f32.mrf.mxu0
    %785 = vdwg.mxu0
    %786 = vmatpush.bf16.msra.mxu0 %v624
    %787 = vmatpush.bf16.msra.mxu0 %v622
    %788 = vmatpush.bf16.msra.mxu0 %v620
    %789 = vmatpush.bf16.msra.mxu0 %v618
    %790 = vmatpush.bf16.msra.mxu0 %v616
    %791 = vmatpush.bf16.msra.mxu0 %v614
    %792 = vmatpush.bf16.msra.mxu0 %v612
    %793 = vmatpush.bf16.msra.mxu0 %v610
    %794 = vmatmul.bf16.gmra.mxu0 %v393
    %v795 = vpop.f32.mrf.mxu0
    %v796 = vadd.f32 %v783, %v795
    %v797 = vpop.f32.mrf.mxu0
    %798 = vdwg.mxu0
    %799 = vmatpush.bf16.msra.mxu0 %v640
    %800 = vmatpush.bf16.msra.mxu0 %v638
    %801 = vmatpush.bf16.msra.mxu0 %v636
    %802 = vmatpush.bf16.msra.mxu0 %v634
    %803 = vmatpush.bf16.msra.mxu0 %v632
    %804 = vmatpush.bf16.msra.mxu0 %v630
    %805 = vmatpush.bf16.msra.mxu0 %v628
    %806 = vmatpush.bf16.msra.mxu0 %v626
    %807 = vmatmul.bf16.gmra.mxu0 %v394
    %v808 = vpop.f32.mrf.mxu0
    %v809 = vadd.f32 %v796, %v808
    %v810 = vpop.f32.mrf.mxu0
    %811 = vdwg.mxu0
    %812 = vmatpush.bf16.msra.mxu0 %v656
    %813 = vmatpush.bf16.msra.mxu0 %v654
    %814 = vmatpush.bf16.msra.mxu0 %v652
    %815 = vmatpush.bf16.msra.mxu0 %v650
    %816 = vmatpush.bf16.msra.mxu0 %v648
    %817 = vmatpush.bf16.msra.mxu0 %v646
    %818 = vmatpush.bf16.msra.mxu0 %v644
    %819 = vmatpush.bf16.msra.mxu0 %v642
    %820 = vmatmul.bf16.gmra.mxu0 %v395
    %v821 = vpop.f32.mrf.mxu0
    %v822 = vadd.f32 %v809, %v821
    %v823 = vpop.f32.mrf.mxu0
    %824 = vdwg.mxu0
    %vm825 = vcmp.gt.f32.partialorder %v770, 0.0
    %vm826 = vcmp.gt.f32.partialorder %v822, 0.0
    %v827 = vmul.f32 %v770, 0.01
    %v828 = vmul.f32 %v822, 0.01
    %v829 = vsel %vm825, %v770, %v827
    %v830 = vsel %vm826, %v822, %v828
    %v831 = vld [vmem:[#allocation5 + $0x500] sm:$0xff]
    %v832 = vld [vmem:[#allocation5 + $0x510] sm:$0xff]
    %v833 = vld [vmem:[#allocation5 + $0x520] sm:$0xff]
    %v834 = vld [vmem:[#allocation5 + $0x530] sm:$0xff]
    %v835 = vld [vmem:[#allocation5 + $0x540] sm:$0xff]
    %v836 = vld [vmem:[#allocation5 + $0x550] sm:$0xff]
    %v837 = vld [vmem:[#allocation5 + $0x560] sm:$0xff]
    %v838 = vld [vmem:[#allocation5 + $0x570] sm:$0xff]
    %v839 = vld [vmem:[#allocation5 + $0x580] sm:$0xff]
    %v840 = vld [vmem:[#allocation5 + $0x590] sm:$0xff]
    %v841 = vld [vmem:[#allocation5 + $0x5a0] sm:$0xff]
    %v842 = vld [vmem:[#allocation5 + $0x5b0] sm:$0xff]
    %v843 = vld [vmem:[#allocation5 + $0x5c0] sm:$0xff]
    %v844 = vld [vmem:[#allocation5 + $0x5d0] sm:$0xff]
    %v845 = vld [vmem:[#allocation5 + $0x5e0] sm:$0xff]
    %v846 = vld [vmem:[#allocation5 + $0x5f0] sm:$0xff]
    %v847 = vld [vmem:[#allocation5 + $0x600] sm:$0xff]
    %v848 = vld [vmem:[#allocation5 + $0x610] sm:$0xff]
    %v849 = vld [vmem:[#allocation5 + $0x620] sm:$0xff]
    %v850 = vld [vmem:[#allocation5 + $0x630] sm:$0xff]
    %v851 = vld [vmem:[#allocation5 + $0x640] sm:$0xff]
    %v852 = vld [vmem:[#allocation5 + $0x650] sm:$0xff]
    %v853 = vld [vmem:[#allocation5 + $0x660] sm:$0xff]
    %v854 = vld [vmem:[#allocation5 + $0x670] sm:$0xff]
    %v855 = vld [vmem:[#allocation5 + $0x680] sm:$0xff]
    %v856 = vld [vmem:[#allocation5 + $0x690] sm:$0xff]
    %v857 = vld [vmem:[#allocation5 + $0x6a0] sm:$0xff]
    %v858 = vld [vmem:[#allocation5 + $0x6b0] sm:$0xff]
    %v859 = vld [vmem:[#allocation5 + $0x6c0] sm:$0xff]
    %v860 = vld [vmem:[#allocation5 + $0x6d0] sm:$0xff]
    %v861 = vld [vmem:[#allocation5 + $0x6e0] sm:$0xff]
    %v862 = vld [vmem:[#allocation5 + $0x6f0] sm:$0xff]
    %s863 = scalar_lea.vmem [#allocation7], 2
    %v864 = vld [vmem:[%s863] ss:$8 sm:$0x3]
    %v865 = vpack.c.bf16 %v829, %v829
    %v866 = vpack.c.bf16 %v830, %v830
    %v868 = vperm.slane %v864, 0
    %v869 = vperm.slane %v864, 1
    %v904 = vunpack.c.l.b16 %v831
    %v905 = vunpack.c.h.b16 %v831
    %v906 = vunpack.c.l.b16 %v832
    %v907 = vunpack.c.h.b16 %v832
    %v908 = vunpack.c.l.b16 %v833
    %v909 = vunpack.c.h.b16 %v833
    %v910 = vunpack.c.l.b16 %v834
    %v911 = vunpack.c.h.b16 %v834
    %v912 = vunpack.c.l.b16 %v835
    %v913 = vunpack.c.h.b16 %v835
    %v914 = vunpack.c.l.b16 %v836
    %v915 = vunpack.c.h.b16 %v836
    %v916 = vunpack.c.l.b16 %v837
    %v917 = vunpack.c.h.b16 %v837
    %v918 = vunpack.c.l.b16 %v838
    %v919 = vunpack.c.h.b16 %v838
    %v920 = vunpack.c.l.b16 %v839
    %v921 = vunpack.c.h.b16 %v839
    %v922 = vunpack.c.l.b16 %v840
    %v923 = vunpack.c.h.b16 %v840
    %v924 = vunpack.c.l.b16 %v841
    %v925 = vunpack.c.h.b16 %v841
    %v926 = vunpack.c.l.b16 %v842
    %v927 = vunpack.c.h.b16 %v842
    %v928 = vunpack.c.l.b16 %v843
    %v929 = vunpack.c.h.b16 %v843
    %v930 = vunpack.c.l.b16 %v844
    %v931 = vunpack.c.h.b16 %v844
    %v932 = vunpack.c.l.b16 %v845
    %v933 = vunpack.c.h.b16 %v845
    %v934 = vunpack.c.l.b16 %v846
    %v935 = vunpack.c.h.b16 %v846
    %v936 = vunpack.c.l.b16 %v847
    %v937 = vunpack.c.h.b16 %v847
    %v938 = vunpack.c.l.b16 %v848
    %v939 = vunpack.c.h.b16 %v848
    %v940 = vunpack.c.l.b16 %v849
    %v941 = vunpack.c.h.b16 %v849
    %v942 = vunpack.c.l.b16 %v850
    %v943 = vunpack.c.h.b16 %v850
    %v944 = vunpack.c.l.b16 %v851
    %v945 = vunpack.c.h.b16 %v851
    %v946 = vunpack.c.l.b16 %v852
    %v947 = vunpack.c.h.b16 %v852
    %v948 = vunpack.c.l.b16 %v853
    %v949 = vunpack.c.h.b16 %v853
    %v950 = vunpack.c.l.b16 %v854
    %v951 = vunpack.c.h.b16 %v854
    %v952 = vunpack.c.l.b16 %v855
    %v953 = vunpack.c.h.b16 %v855
    %v954 = vunpack.c.l.b16 %v856
    %v955 = vunpack.c.h.b16 %v856
    %v956 = vunpack.c.l.b16 %v857
    %v957 = vunpack.c.h.b16 %v857
    %v958 = vunpack.c.l.b16 %v858
    %v959 = vunpack.c.h.b16 %v858
    %v960 = vunpack.c.l.b16 %v859
    %v961 = vunpack.c.h.b16 %v859
    %v962 = vunpack.c.l.b16 %v860
    %v963 = vunpack.c.h.b16 %v860
    %v964 = vunpack.c.l.b16 %v861
    %v965 = vunpack.c.h.b16 %v861
    %v966 = vunpack.c.l.b16 %v862
    %v967 = vunpack.c.h.b16 %v862
    %v968 = vpack.c.b16 %v906, %v904
    %v969 = vpack.c.b16 %v907, %v905
    %v970 = vpack.c.b16 %v910, %v908
    %v971 = vpack.c.b16 %v911, %v909
    %v972 = vpack.c.b16 %v914, %v912
    %v973 = vpack.c.b16 %v915, %v913
    %v974 = vpack.c.b16 %v918, %v916
    %v975 = vpack.c.b16 %v919, %v917
    %v976 = vpack.c.b16 %v922, %v920
    %v977 = vpack.c.b16 %v923, %v921
    %v978 = vpack.c.b16 %v926, %v924
    %v979 = vpack.c.b16 %v927, %v925
    %v980 = vpack.c.b16 %v930, %v928
    %v981 = vpack.c.b16 %v931, %v929
    %v982 = vpack.c.b16 %v934, %v932
    %v983 = vpack.c.b16 %v935, %v933
    %v984 = vpack.c.b16 %v938, %v936
    %v985 = vpack.c.b16 %v939, %v937
    %v986 = vpack.c.b16 %v942, %v940
    %v987 = vpack.c.b16 %v943, %v941
    %v988 = vpack.c.b16 %v946, %v944
    %v989 = vpack.c.b16 %v947, %v945
    %v990 = vpack.c.b16 %v950, %v948
    %v991 = vpack.c.b16 %v951, %v949
    %v992 = vpack.c.b16 %v954, %v952
    %v993 = vpack.c.b16 %v955, %v953
    %v994 = vpack.c.b16 %v958, %v956
    %v995 = vpack.c.b16 %v959, %v957
    %v996 = vpack.c.b16 %v962, %v960
    %v997 = vpack.c.b16 %v963, %v961
    %v998 = vpack.c.b16 %v966, %v964
    %v999 = vpack.c.b16 %v967, %v965
    %1032 = vmatpush.bf16.msra.mxu0 %v982
    %1033 = vmatpush.bf16.msra.mxu0 %v980
    %1034 = vmatpush.bf16.msra.mxu0 %v978
    %1035 = vmatpush.bf16.msra.mxu0 %v976
    %1036 = vmatpush.bf16.msra.mxu0 %v974
    %1037 = vmatpush.bf16.msra.mxu0 %v972
    %1038 = vmatpush.bf16.msra.mxu0 %v970
    %1039 = vmatpush.bf16.msra.mxu0 %v968
    %1040 = vmatmul.bf16.gmra.mxu0 %v865
    %v1041 = vpop.f32.mrf.mxu0
    %v1042 = vadd.f32 %v868, %v1041
    %v1043 = vpop.f32.mrf.mxu0
    %1044 = vdwg.mxu0
    %1045 = vmatpush.bf16.msra.mxu0 %v998
    %1046 = vmatpush.bf16.msra.mxu0 %v996
    %1047 = vmatpush.bf16.msra.mxu0 %v994
    %1048 = vmatpush.bf16.msra.mxu0 %v992
    %1049 = vmatpush.bf16.msra.mxu0 %v990
    %1050 = vmatpush.bf16.msra.mxu0 %v988
    %1051 = vmatpush.bf16.msra.mxu0 %v986
    %1052 = vmatpush.bf16.msra.mxu0 %v984
    %1053 = vmatmul.bf16.gmra.mxu0 %v866
    %v1054 = vpop.f32.mrf.mxu0
    %v1055 = vadd.f32 %v1042, %v1054
    %v1056 = vpop.f32.mrf.mxu0
    %1057 = vdwg.mxu0
    %1058 = vmatpush.bf16.msra.mxu0 %v983
    %1059 = vmatpush.bf16.msra.mxu0 %v981
    %1060 = vmatpush.bf16.msra.mxu0 %v979
    %1061 = vmatpush.bf16.msra.mxu0 %v977
    %1062 = vmatpush.bf16.msra.mxu0 %v975
    %1063 = vmatpush.bf16.msra.mxu0 %v973
    %1064 = vmatpush.bf16.msra.mxu0 %v971
    %1065 = vmatpush.bf16.msra.mxu0 %v969
    %1066 = vmatmul.bf16.gmra.mxu0 %v865
    %v1067 = vpop.f32.mrf.mxu0
    %v1068 = vadd.f32 %v869, %v1067
    %v1069 = vpop.f32.mrf.mxu0
    %1070 = vdwg.mxu0
    %1071 = vmatpush.bf16.msra.mxu0 %v999
    %1072 = vmatpush.bf16.msra.mxu0 %v997
    %1073 = vmatpush.bf16.msra.mxu0 %v995
    %1074 = vmatpush.bf16.msra.mxu0 %v993
    %1075 = vmatpush.bf16.msra.mxu0 %v991
    %1076 = vmatpush.bf16.msra.mxu0 %v989
    %1077 = vmatpush.bf16.msra.mxu0 %v987
    %1078 = vmatpush.bf16.msra.mxu0 %v985
    %1079 = vmatmul.bf16.gmra.mxu0 %v866
    %v1080 = vpop.f32.mrf.mxu0
    %v1081 = vadd.f32 %v1068, %v1080
    %v1082 = vpop.f32.mrf.mxu0
    %1083 = vdwg.mxu0
    %vm1084 = vcmp.gt.f32.partialorder %v1055, 0.0
    %vm1085 = vcmp.gt.f32.partialorder %v1081, 0.0
    %v1086 = vmul.f32 %v1055, 0.01
    %v1087 = vmul.f32 %v1081, 0.01
    %v1088 = vsel %vm1084, %v1055, %v1086
    %v1089 = vsel %vm1085, %v1081, %v1087
    %v1090 = vld [vmem:[#allocation5 + $0x700] sm:$0xf]
    %v1091 = vld [vmem:[#allocation5 + $0x710] sm:$0xf]
    %v1092 = vld [vmem:[#allocation5 + $0x720] sm:$0xf]
    %v1093 = vld [vmem:[#allocation5 + $0x730] sm:$0xf]
    %v1094 = vld [vmem:[#allocation5 + $0x740] sm:$0xf]
    %v1095 = vld [vmem:[#allocation5 + $0x750] sm:$0xf]
    %v1096 = vld [vmem:[#allocation5 + $0x760] sm:$0xf]
    %v1097 = vld [vmem:[#allocation5 + $0x770] sm:$0xf]
    %v1098 = vld [vmem:[#allocation5 + $0x780] sm:$0xf]
    %v1099 = vld [vmem:[#allocation5 + $0x790] sm:$0xf]
    %v1100 = vld [vmem:[#allocation5 + $0x7a0] sm:$0xf]
    %v1101 = vld [vmem:[#allocation5 + $0x7b0] sm:$0xf]
    %v1102 = vld [vmem:[#allocation5 + $0x7c0] sm:$0xf]
    %v1103 = vld [vmem:[#allocation5 + $0x7d0] sm:$0xf]
    %v1104 = vld [vmem:[#allocation5 + $0x7e0] sm:$0xf]
    %v1105 = vld [vmem:[#allocation5 + $0x7f0] sm:$0xf]
    %v1106 = vld [vmem:[#allocation5 + $0x800] sm:$0xf]
    %v1107 = vld [vmem:[#allocation5 + $0x810] sm:$0xf]
    %v1108 = vld [vmem:[#allocation5 + $0x820] sm:$0xf]
    %v1109 = vld [vmem:[#allocation5 + $0x830] sm:$0xf]
    %v1110 = vld [vmem:[#allocation5 + $0x840] sm:$0xf]
    %v1111 = vld [vmem:[#allocation5 + $0x850] sm:$0xf]
    %v1112 = vld [vmem:[#allocation5 + $0x860] sm:$0xf]
    %v1113 = vld [vmem:[#allocation5 + $0x870] sm:$0xf]
    %v1114 = vld [vmem:[#allocation5 + $0x880] sm:$0xf]
    %v1115 = vld [vmem:[#allocation5 + $0x890] sm:$0xf]
    %v1116 = vld [vmem:[#allocation5 + $0x8a0] sm:$0xf]
    %v1117 = vld [vmem:[#allocation5 + $0x8b0] sm:$0xf]
    %v1118 = vld [vmem:[#allocation5 + $0x8c0] sm:$0xf]
    %v1119 = vld [vmem:[#allocation5 + $0x8d0] sm:$0xf]
    %v1120 = vld [vmem:[#allocation5 + $0x8e0] sm:$0xf]
    %v1121 = vld [vmem:[#allocation5 + $0x8f0] sm:$0xf]
    %v1122 = vld [vmem:[#allocation7 + $0x3] ss:$0 sm:$0xff]
    %v1123 = vpack.c.bf16 %v1088, %v1088
    %v1124 = vpack.c.bf16 %v1089, %v1089
    %v1157 = vunpack.c.l.b16 %v1090
    %v1158 = vunpack.c.l.b16 %v1091
    %v1159 = vunpack.c.l.b16 %v1092
    %v1160 = vunpack.c.l.b16 %v1093
    %v1161 = vunpack.c.l.b16 %v1094
    %v1162 = vunpack.c.l.b16 %v1095
    %v1163 = vunpack.c.l.b16 %v1096
    %v1164 = vunpack.c.l.b16 %v1097
    %v1165 = vunpack.c.l.b16 %v1098
    %v1166 = vunpack.c.l.b16 %v1099
    %v1167 = vunpack.c.l.b16 %v1100
    %v1168 = vunpack.c.l.b16 %v1101
    %v1169 = vunpack.c.l.b16 %v1102
    %v1170 = vunpack.c.l.b16 %v1103
    %v1171 = vunpack.c.l.b16 %v1104
    %v1172 = vunpack.c.l.b16 %v1105
    %v1173 = vunpack.c.l.b16 %v1106
    %v1174 = vunpack.c.l.b16 %v1107
    %v1175 = vunpack.c.l.b16 %v1108
    %v1176 = vunpack.c.l.b16 %v1109
    %v1177 = vunpack.c.l.b16 %v1110
    %v1178 = vunpack.c.l.b16 %v1111
    %v1179 = vunpack.c.l.b16 %v1112
    %v1180 = vunpack.c.l.b16 %v1113
    %v1181 = vunpack.c.l.b16 %v1114
    %v1182 = vunpack.c.l.b16 %v1115
    %v1183 = vunpack.c.l.b16 %v1116
    %v1184 = vunpack.c.l.b16 %v1117
    %v1185 = vunpack.c.l.b16 %v1118
    %v1186 = vunpack.c.l.b16 %v1119
    %v1187 = vunpack.c.l.b16 %v1120
    %v1188 = vunpack.c.l.b16 %v1121
    %v1189 = vpack.c.b16 %v1158, %v1157
    %v1190 = vpack.c.b16 %v1160, %v1159
    %v1191 = vpack.c.b16 %v1162, %v1161
    %v1192 = vpack.c.b16 %v1164, %v1163
    %v1193 = vpack.c.b16 %v1166, %v1165
    %v1194 = vpack.c.b16 %v1168, %v1167
    %v1195 = vpack.c.b16 %v1170, %v1169
    %v1196 = vpack.c.b16 %v1172, %v1171
    %v1197 = vpack.c.b16 %v1174, %v1173
    %v1198 = vpack.c.b16 %v1176, %v1175
    %v1199 = vpack.c.b16 %v1178, %v1177
    %v1200 = vpack.c.b16 %v1180, %v1179
    %v1201 = vpack.c.b16 %v1182, %v1181
    %v1202 = vpack.c.b16 %v1184, %v1183
    %v1203 = vpack.c.b16 %v1186, %v1185
    %v1204 = vpack.c.b16 %v1188, %v1187
    %1221 = vmatpush.bf16.msra.mxu0 %v1196
    %1222 = vmatpush.bf16.msra.mxu0 %v1195
    %1223 = vmatpush.bf16.msra.mxu0 %v1194
    %1224 = vmatpush.bf16.msra.mxu0 %v1193
    %1225 = vmatpush.bf16.msra.mxu0 %v1192
    %1226 = vmatpush.bf16.msra.mxu0 %v1191
    %1227 = vmatpush.bf16.msra.mxu0 %v1190
    %1228 = vmatpush.bf16.msra.mxu0 %v1189
    %1229 = vmatmul.bf16.gmra.mxu0 %v1123
    %v1230 = vpop.f32.mrf.mxu0
    %v1231 = vadd.f32 %v1122, %v1230
    %v1232 = vpop.f32.mrf.mxu0
    %1233 = vdwg.mxu0
    %1234 = vmatpush.bf16.msra.mxu0 %v1204
    %1235 = vmatpush.bf16.msra.mxu0 %v1203
    %1236 = vmatpush.bf16.msra.mxu0 %v1202
    %1237 = vmatpush.bf16.msra.mxu0 %v1201
    %1238 = vmatpush.bf16.msra.mxu0 %v1200
    %1239 = vmatpush.bf16.msra.mxu0 %v1199
    %1240 = vmatpush.bf16.msra.mxu0 %v1198
    %1241 = vmatpush.bf16.msra.mxu0 %v1197
    %1242 = vmatmul.bf16.gmra.mxu0 %v1124
    %v1243 = vpop.f32.mrf.mxu0
    %v1244 = vadd.f32 %v1231, %v1243
    %v1245 = vpop.f32.mrf.mxu0
    %1246 = vdwg.mxu0
    %vm1247 = vcmp.gt.f32.partialorder %v1244, 0.0
    %v1248 = vmul.f32 %v1244, 0.01
    %v1249 = vsel %vm1247, %v1244, %v1248
    %v1250 = vld [vmem:[#allocation5 + $0x900] sm:$0xf]
    %v1251 = vld [vmem:[#allocation5 + $0x910] sm:$0xf]
    %v1252 = vld [vmem:[#allocation5 + $0x920] sm:$0xf]
    %v1253 = vld [vmem:[#allocation5 + $0x930] sm:$0xf]
    %v1254 = vld [vmem:[#allocation5 + $0x940] sm:$0xf]
    %v1255 = vld [vmem:[#allocation5 + $0x950] sm:$0xf]
    %v1256 = vld [vmem:[#allocation5 + $0x960] sm:$0xf]
    %v1257 = vld [vmem:[#allocation5 + $0x970] sm:$0xf]
    %v1258 = vld [vmem:[#allocation5 + $0x980] sm:$0xf]
    %v1259 = vld [vmem:[#allocation5 + $0x990] sm:$0xf]
    %v1260 = vld [vmem:[#allocation5 + $0x9a0] sm:$0xf]
    %v1261 = vld [vmem:[#allocation5 + $0x9b0] sm:$0xf]
    %v1262 = vld [vmem:[#allocation5 + $0x9c0] sm:$0xf]
    %v1263 = vld [vmem:[#allocation5 + $0x9d0] sm:$0xf]
    %v1264 = vld [vmem:[#allocation5 + $0x9e0] sm:$0xf]
    %v1265 = vld [vmem:[#allocation5 + $0x9f0] sm:$0xf]
    %v1266 = vld [vmem:[#allocation7 + $0x4] ss:$0 sm:$0xff]
    %v1267 = vpack.c.bf16 %v1249, %v1249
    %v1284 = vunpack.c.l.b16 %v1250
    %v1285 = vunpack.c.l.b16 %v1251
    %v1286 = vunpack.c.l.b16 %v1252
    %v1287 = vunpack.c.l.b16 %v1253
    %v1288 = vunpack.c.l.b16 %v1254
    %v1289 = vunpack.c.l.b16 %v1255
    %v1290 = vunpack.c.l.b16 %v1256
    %v1291 = vunpack.c.l.b16 %v1257
    %v1292 = vunpack.c.l.b16 %v1258
    %v1293 = vunpack.c.l.b16 %v1259
    %v1294 = vunpack.c.l.b16 %v1260
    %v1295 = vunpack.c.l.b16 %v1261
    %v1296 = vunpack.c.l.b16 %v1262
    %v1297 = vunpack.c.l.b16 %v1263
    %v1298 = vunpack.c.l.b16 %v1264
    %v1299 = vunpack.c.l.b16 %v1265
    %v1300 = vpack.c.b16 %v1285, %v1284
    %v1301 = vpack.c.b16 %v1287, %v1286
    %v1302 = vpack.c.b16 %v1289, %v1288
    %v1303 = vpack.c.b16 %v1291, %v1290
    %v1304 = vpack.c.b16 %v1293, %v1292
    %v1305 = vpack.c.b16 %v1295, %v1294
    %v1306 = vpack.c.b16 %v1297, %v1296
    %v1307 = vpack.c.b16 %v1299, %v1298
    %1316 = vmatpush.bf16.msra.mxu0 %v1307
    %1317 = vmatpush.bf16.msra.mxu0 %v1306
    %1318 = vmatpush.bf16.msra.mxu0 %v1305
    %1319 = vmatpush.bf16.msra.mxu0 %v1304
    %1320 = vmatpush.bf16.msra.mxu0 %v1303
    %1321 = vmatpush.bf16.msra.mxu0 %v1302
    %1322 = vmatpush.bf16.msra.mxu0 %v1301
    %1323 = vmatpush.bf16.msra.mxu0 %v1300
    %1324 = vmatmul.bf16.gmra.mxu0 %v1267
    %v1325 = vpop.f32.mrf.mxu0
    %v1326 = vadd.f32 %v1266, %v1325
    %v1327 = vpop.f32.mrf.mxu0
    %1328 = vdwg.mxu0
    %vm1329 = vcmp.gt.f32.partialorder %v1326, 0.0
    %v1330 = vmul.f32 %v1326, 0.01
    %v1331 = vsel %vm1329, %v1326, %v1330
    %v1332 = vld [vmem:[#allocation5 + $0xa00] sm:$0xf]
    %v1333 = vld [vmem:[#allocation5 + $0xa10] sm:$0xf]
    %v1334 = vld [vmem:[#allocation5 + $0xa20] sm:$0xf]
    %v1335 = vld [vmem:[#allocation5 + $0xa30] sm:$0xf]
    %v1336 = vld [vmem:[#allocation5 + $0xa40] sm:$0xf]
    %v1337 = vld [vmem:[#allocation5 + $0xa50] sm:$0xf]
    %v1338 = vld [vmem:[#allocation5 + $0xa60] sm:$0xf]
    %v1339 = vld [vmem:[#allocation5 + $0xa70] sm:$0xf]
    %v1340 = vld [vmem:[#allocation5 + $0xa80] sm:$0xf]
    %v1341 = vld [vmem:[#allocation5 + $0xa90] sm:$0xf]
    %v1342 = vld [vmem:[#allocation5 + $0xaa0] sm:$0xf]
    %v1343 = vld [vmem:[#allocation5 + $0xab0] sm:$0xf]
    %v1344 = vld [vmem:[#allocation5 + $0xac0] sm:$0xf]
    %v1345 = vld [vmem:[#allocation5 + $0xad0] sm:$0xf]
    %v1346 = vld [vmem:[#allocation5 + $0xae0] sm:$0xf]
    %v1347 = vld [vmem:[#allocation5 + $0xaf0] sm:$0xf]
    %v1348 = vld [vmem:[#allocation7 + $0x5] ss:$0 sm:$0xff]
    %v1349 = vpack.c.bf16 %v1331, %v1331
    %v1366 = vunpack.c.l.b16 %v1332
    %v1367 = vunpack.c.l.b16 %v1333
    %v1368 = vunpack.c.l.b16 %v1334
    %v1369 = vunpack.c.l.b16 %v1335
    %v1370 = vunpack.c.l.b16 %v1336
    %v1371 = vunpack.c.l.b16 %v1337
    %v1372 = vunpack.c.l.b16 %v1338
    %v1373 = vunpack.c.l.b16 %v1339
    %v1374 = vunpack.c.l.b16 %v1340
    %v1375 = vunpack.c.l.b16 %v1341
    %v1376 = vunpack.c.l.b16 %v1342
    %v1377 = vunpack.c.l.b16 %v1343
    %v1378 = vunpack.c.l.b16 %v1344
    %v1379 = vunpack.c.l.b16 %v1345
    %v1380 = vunpack.c.l.b16 %v1346
    %v1381 = vunpack.c.l.b16 %v1347
    %v1382 = vpack.c.b16 %v1367, %v1366
    %v1383 = vpack.c.b16 %v1369, %v1368
    %v1384 = vpack.c.b16 %v1371, %v1370
    %v1385 = vpack.c.b16 %v1373, %v1372
    %v1386 = vpack.c.b16 %v1375, %v1374
    %v1387 = vpack.c.b16 %v1377, %v1376
    %v1388 = vpack.c.b16 %v1379, %v1378
    %v1389 = vpack.c.b16 %v1381, %v1380
    %1398 = vmatpush.bf16.msra.mxu0 %v1389
    %1399 = vmatpush.bf16.msra.mxu0 %v1388
    %1400 = vmatpush.bf16.msra.mxu0 %v1387
    %1401 = vmatpush.bf16.msra.mxu0 %v1386
    %1402 = vmatpush.bf16.msra.mxu0 %v1385
    %1403 = vmatpush.bf16.msra.mxu0 %v1384
    %1404 = vmatpush.bf16.msra.mxu0 %v1383
    %1405 = vmatpush.bf16.msra.mxu0 %v1382
    %1406 = vmatmul.bf16.gmra.mxu0 %v1349
    %v1407 = vpop.f32.mrf.mxu0
    %v1408 = vadd.f32 %v1348, %v1407
    %v1409 = vpop.f32.mrf.mxu0
    %1410 = vdwg.mxu0
    %vm1411 = vcmp.gt.f32.partialorder %v1408, 0.0
    %v1412 = vmul.f32 %v1408, 0.01
    %v1413 = vsel %vm1411, %v1408, %v1412
    %v1414 = vld [vmem:[#allocation5 + $0xb00] sm:$0xf]
    %v1415 = vld [vmem:[#allocation5 + $0xb10] sm:$0xf]
    %v1416 = vld [vmem:[#allocation5 + $0xb20] sm:$0xf]
    %v1417 = vld [vmem:[#allocation5 + $0xb30] sm:$0xf]
    %v1418 = vld [vmem:[#allocation5 + $0xb40] sm:$0xf]
    %v1419 = vld [vmem:[#allocation5 + $0xb50] sm:$0xf]
    %v1420 = vld [vmem:[#allocation5 + $0xb60] sm:$0xf]
    %v1421 = vld [vmem:[#allocation5 + $0xb70] sm:$0xf]
    %v1422 = vld [vmem:[#allocation5 + $0xb80] sm:$0xf]
    %v1423 = vld [vmem:[#allocation5 + $0xb90] sm:$0xf]
    %v1424 = vld [vmem:[#allocation5 + $0xba0] sm:$0xf]
    %v1425 = vld [vmem:[#allocation5 + $0xbb0] sm:$0xf]
    %v1426 = vld [vmem:[#allocation5 + $0xbc0] sm:$0xf]
    %v1427 = vld [vmem:[#allocation5 + $0xbd0] sm:$0xf]
    %v1428 = vld [vmem:[#allocation5 + $0xbe0] sm:$0xf]
    %v1429 = vld [vmem:[#allocation5 + $0xbf0] sm:$0xf]
    %v1430 = vld [vmem:[#allocation7 + $0x6] ss:$0 sm:$0xff]
    %v1431 = vpack.c.bf16 %v1413, %v1413
    %v1448 = vunpack.c.l.b16 %v1414
    %v1449 = vunpack.c.l.b16 %v1415
    %v1450 = vunpack.c.l.b16 %v1416
    %v1451 = vunpack.c.l.b16 %v1417
    %v1452 = vunpack.c.l.b16 %v1418
    %v1453 = vunpack.c.l.b16 %v1419
    %v1454 = vunpack.c.l.b16 %v1420
    %v1455 = vunpack.c.l.b16 %v1421
    %v1456 = vunpack.c.l.b16 %v1422
    %v1457 = vunpack.c.l.b16 %v1423
    %v1458 = vunpack.c.l.b16 %v1424
    %v1459 = vunpack.c.l.b16 %v1425
    %v1460 = vunpack.c.l.b16 %v1426
    %v1461 = vunpack.c.l.b16 %v1427
    %v1462 = vunpack.c.l.b16 %v1428
    %v1463 = vunpack.c.l.b16 %v1429
    %v1464 = vpack.c.b16 %v1449, %v1448
    %v1465 = vpack.c.b16 %v1451, %v1450
    %v1466 = vpack.c.b16 %v1453, %v1452
    %v1467 = vpack.c.b16 %v1455, %v1454
    %v1468 = vpack.c.b16 %v1457, %v1456
    %v1469 = vpack.c.b16 %v1459, %v1458
    %v1470 = vpack.c.b16 %v1461, %v1460
    %v1471 = vpack.c.b16 %v1463, %v1462
    %1480 = vmatpush.bf16.msra.mxu0 %v1471
    %1481 = vmatpush.bf16.msra.mxu0 %v1470
    %1482 = vmatpush.bf16.msra.mxu0 %v1469
    %1483 = vmatpush.bf16.msra.mxu0 %v1468
    %1484 = vmatpush.bf16.msra.mxu0 %v1467
    %1485 = vmatpush.bf16.msra.mxu0 %v1466
    %1486 = vmatpush.bf16.msra.mxu0 %v1465
    %1487 = vmatpush.bf16.msra.mxu0 %v1464
    %1488 = vmatmul.bf16.gmra.mxu0 %v1431
    %v1489 = vpop.f32.mrf.mxu0
    %v1490 = vadd.f32 %v1430, %v1489
    %v1491 = vpop.f32.mrf.mxu0
    %1492 = vdwg.mxu0
    %vm1493 = vcmp.gt.f32.partialorder %v1490, 0.0
    %v1494 = vmul.f32 %v1490, 0.01
    %v1495 = vsel %vm1493, %v1490, %v1494
    %v1496 = vld [vmem:[#allocation5 + $0xc00] sm:$0xf]
    %v1497 = vld [vmem:[#allocation5 + $0xc10] sm:$0xf]
    %v1498 = vld [vmem:[#allocation5 + $0xc20] sm:$0xf]
    %v1499 = vld [vmem:[#allocation5 + $0xc30] sm:$0xf]
    %v1500 = vld [vmem:[#allocation5 + $0xc40] sm:$0xf]
    %v1501 = vld [vmem:[#allocation5 + $0xc50] sm:$0xf]
    %v1502 = vld [vmem:[#allocation5 + $0xc60] sm:$0xf]
    %v1503 = vld [vmem:[#allocation5 + $0xc70] sm:$0xf]
    %v1504 = vld [vmem:[#allocation5 + $0xc80] sm:$0xf]
    %v1505 = vld [vmem:[#allocation5 + $0xc90] sm:$0xf]
    %v1506 = vld [vmem:[#allocation5 + $0xca0] sm:$0xf]
    %v1507 = vld [vmem:[#allocation5 + $0xcb0] sm:$0xf]
    %v1508 = vld [vmem:[#allocation5 + $0xcc0] sm:$0xf]
    %v1509 = vld [vmem:[#allocation5 + $0xcd0] sm:$0xf]
    %v1510 = vld [vmem:[#allocation5 + $0xce0] sm:$0xf]
    %v1511 = vld [vmem:[#allocation5 + $0xcf0] sm:$0xf]
    %v1512 = vld [vmem:[#allocation7 + $0x7] ss:$0 sm:$0xff]
    %v1513 = vpack.c.bf16 %v1495, %v1495
    %v1530 = vunpack.c.l.b16 %v1496
    %v1531 = vunpack.c.l.b16 %v1497
    %v1532 = vunpack.c.l.b16 %v1498
    %v1533 = vunpack.c.l.b16 %v1499
    %v1534 = vunpack.c.l.b16 %v1500
    %v1535 = vunpack.c.l.b16 %v1501
    %v1536 = vunpack.c.l.b16 %v1502
    %v1537 = vunpack.c.l.b16 %v1503
    %v1538 = vunpack.c.l.b16 %v1504
    %v1539 = vunpack.c.l.b16 %v1505
    %v1540 = vunpack.c.l.b16 %v1506
    %v1541 = vunpack.c.l.b16 %v1507
    %v1542 = vunpack.c.l.b16 %v1508
    %v1543 = vunpack.c.l.b16 %v1509
    %v1544 = vunpack.c.l.b16 %v1510
    %v1545 = vunpack.c.l.b16 %v1511
    %v1546 = vpack.c.b16 %v1531, %v1530
    %v1547 = vpack.c.b16 %v1533, %v1532
    %v1548 = vpack.c.b16 %v1535, %v1534
    %v1549 = vpack.c.b16 %v1537, %v1536
    %v1550 = vpack.c.b16 %v1539, %v1538
    %v1551 = vpack.c.b16 %v1541, %v1540
    %v1552 = vpack.c.b16 %v1543, %v1542
    %v1553 = vpack.c.b16 %v1545, %v1544
    %1562 = vmatpush.bf16.msra.mxu0 %v1553
    %1563 = vmatpush.bf16.msra.mxu0 %v1552
    %1564 = vmatpush.bf16.msra.mxu0 %v1551
    %1565 = vmatpush.bf16.msra.mxu0 %v1550
    %1566 = vmatpush.bf16.msra.mxu0 %v1549
    %1567 = vmatpush.bf16.msra.mxu0 %v1548
    %1568 = vmatpush.bf16.msra.mxu0 %v1547
    %1569 = vmatpush.bf16.msra.mxu0 %v1546
    %1570 = vmatmul.bf16.gmra.mxu0 %v1513
    %v1571 = vpop.f32.mrf.mxu0
    %v1572 = vadd.f32 %v1512, %v1571
    %v1573 = vpop.f32.mrf.mxu0
    %1574 = vdwg.mxu0
    %1575 = vst [vmem:[#allocation8] sm:$0xff] %v1572
    // Predicated region
    $region26: #{tpu_custom_call.1} parent=1 // pred_check
      _
    $region27: #{tpu_custom_call.1} parent=1 // pred_check_branch
      %1577 = sbr.rel (0) target = $region29
    $region28: #{tpu_custom_call.1} parent=1 // pred_region
      %1579 = vsyncadd [#allocation4], 0
      %s1581 = sshll.u32 [#allocation8], 4
      %s1582 = int_to_ptr.vmem [resolvable:$true] %s1581
      %s1583 = sshll.u32 %s3, 4
      %s1584 = int_to_ptr.hbm [resolvable:$true] %s1583
      %1586 = dma.vmem_to_hbm [thread:$0]  %s1582, 128, %s1584, [#allocation4]
    $region29: #{tpu_custom_call.1} parent=1 // pred_fallthru
      _
    // Predicated region
    $region30: #{tpu_custom_call.1} parent=1 // pred_check
      _
    $region31: #{tpu_custom_call.1} parent=1 // pred_check_branch
      %1588 = sbr.rel (0) target = $region33
    $region32: #{tpu_custom_call.1} parent=1 // pred_region
      %1590 = dma.done [#allocation4], 128
    $region33: #{tpu_custom_call.1} parent=1 // pred_fallthru
      _
    %1591 = vsyncpa [#allocation3], 1
    %1592 = vsyncpa [#allocation6], 1
    %1593 = vsyncpa [#allocation4], 1

</llo_original>
